<compile_context>
chip_gen: v7x
topology: tpu7x:2x2x1
jax: 0.10.0
libtpu: 0.0.40
codegen_flags: <defaults>
</compile_context>

<pallas_src>
import jax
import jax.numpy as jnp
from jax.experimental import pallas as pl
from jax.experimental.pallas import tpu as pltpu


def mlp_kernel(x_ref, w1_ref, b1_ref, w2_ref, b2_ref, o_ref):
    # First linear layer: (TM, D_in) bf16 @ (D_in, H) bf16 -> f32 accumulation.
    h = jnp.dot(x_ref[...], w1_ref[...], preferred_element_type=jnp.float32)
    h = h + b1_ref[...]                       # bias kept in f32 (VPU add)
    # LeakyReLU, PyTorch default negative_slope = 0.01
    h = jnp.where(h > 0, h, 0.01 * h)
    # Second linear layer: (TM, H) bf16 @ (H, D_out) bf16 -> f32 accumulation.
    out = jnp.dot(h.astype(jnp.bfloat16), w2_ref[...],
                  preferred_element_type=jnp.float32)
    out = out + b2_ref[...]
    o_ref[...] = out.astype(o_ref.dtype)


def mlp_forward(x_nchw, w1, b1, w2, b2, *, block_m=512):
    """x_nchw: (B, C, H, W). Returns (B, output_dim) float32."""
    B = x_nchw.shape[0]
    x_flat = x_nchw.reshape(B, -1)                     # nn.Flatten()
    input_dim = x_flat.shape[1]
    hidden_dim = w1.shape[1]
    output_dim = w2.shape[1]

    assert w1.shape == (input_dim, hidden_dim)
    assert w2.shape == (hidden_dim, output_dim)

    # Halve HBM traffic: activations + weights in bf16, biases stay f32.
    x_bf = x_flat.astype(jnp.bfloat16)
    w1_bf = w1.astype(jnp.bfloat16)
    w2_bf = w2.astype(jnp.bfloat16)
    b1_2d = b1.reshape(1, hidden_dim).astype(jnp.float32)
    b2_2d = b2.reshape(1, output_dim).astype(jnp.float32)

    # Batch (M) tiling: weights are loaded once and reused across all tiles.
    # If B < block_m the tile equals the full batch dim (always legal).
    tm = min(block_m, B)
    grid_m = pl.cdiv(B, tm)

    # Advisory cost hint for the XLA scheduler.
    flops = 2 * B * (input_dim * hidden_dim + hidden_dim * output_dim)
    bytes_accessed = (x_bf.size * 2 + w1_bf.size * 2 + w2_bf.size * 2
                      + b1_2d.size * 4 + b2_2d.size * 4
                      + B * output_dim * 4)

    # NOTE: output_dim=32 < 128 lanes -> masked stores on the output slab.
    # Accepted at this size (tiny writeback); if output_dim scales, pad it to
    # a multiple of 128 (or batch multiple heads) to get unmasked lane-dense
    # stores, which is the biggest single lever for the store path.
    return pl.pallas_call(
        mlp_kernel,
        out_shape=jax.ShapeDtypeStruct((B, output_dim), jnp.float32),
        grid_spec=pltpu.PrefetchScalarGridSpec(
            num_scalar_prefetch=0,
            grid=(grid_m,),
            in_specs=[
                pl.BlockSpec((tm, input_dim), lambda i: (i, 0)),          # x tile
                pl.BlockSpec((input_dim, hidden_dim), lambda i: (0, 0)),  # W1 resident
                pl.BlockSpec((1, hidden_dim), lambda i: (0, 0)),          # b1 resident
                pl.BlockSpec((hidden_dim, output_dim), lambda i: (0, 0)), # W2 resident
                pl.BlockSpec((1, output_dim), lambda i: (0, 0)),          # b2 resident
            ],
            out_specs=pl.BlockSpec((tm, output_dim), lambda i: (i, 0)),
        ),
        compiler_params=pltpu.CompilerParams(
            dimension_semantics=("parallel",),      # batch tiles across TCs (v7x)
            vmem_limit_bytes=32 * 1024 * 1024,      # safe on v5e/v6e/v7x at these shapes
        ),
        cost_estimate=pl.CostEstimate(
            flops=flops, transcendentals=0, bytes_accessed=bytes_accessed),
    )(x_bf, w1_bf, b1_2d, w2_bf, b2_2d)


def init_params(key, input_dim, output_dim, hidden_dim=256):
    """Deterministic init mimicking nn.Linear's U(-1/sqrt(fan_in), 1/sqrt(fan_in))."""
    k1, k2, k3, k4 = jax.random.split(key, 4)
    bound1 = 1.0 / (input_dim ** 0.5)
    bound2 = 1.0 / (hidden_dim ** 0.5)
    w1 = jax.random.uniform(k1, (input_dim, hidden_dim), jnp.float32,
                            minval=-bound1, maxval=bound1)
    b1 = jax.random.uniform(k2, (hidden_dim,), jnp.float32,
                            minval=-bound1, maxval=bound1)
    w2 = jax.random.uniform(k3, (hidden_dim, output_dim), jnp.float32,
                            minval=-bound2, maxval=bound2)
    b2 = jax.random.uniform(k4, (output_dim,), jnp.float32,
                            minval=-bound2, maxval=bound2)
    return w1, b1, w2, b2


if __name__ == "__main__":
    key = jax.random.PRNGKey(0)
    k_x, k_p = jax.random.split(key)

    # Small shapes: batch=2, channels=4, spatial=16x16 -> input_dim = 1024
    B, C, H, W = 2, 4, 16, 16
    input_dim = C * H * W
    hidden_dim = 256
    output_dim = 32

    x = jax.random.normal(k_x, (B, C, H, W), dtype=jnp.float32)
    w1, b1, w2, b2 = init_params(k_p, input_dim, output_dim, hidden_dim)

    out = mlp_forward(x, w1, b1, w2, b2)
    jax.block_until_ready(out)
    assert out.shape == (B, output_dim)

    # Reference with matching bf16 inputs / f32 accumulation (kernel uses bf16
    # weights, so an exact-f32 comparison at 1e-4 would be too strict).
    x_bf = x.reshape(B, -1).astype(jnp.bfloat16)
    h_ref = jnp.dot(x_bf, w1.astype(jnp.bfloat16),
                    preferred_element_type=jnp.float32) + b1
    h_ref = jnp.where(h_ref > 0, h_ref, 0.01 * h_ref)
    out_ref = jnp.dot(h_ref.astype(jnp.bfloat16), w2.astype(jnp.bfloat16),
                      preferred_element_type=jnp.float32) + b2
    assert jnp.allclose(out, out_ref, atol=2e-2, rtol=2e-2)

    # Sanity check against the pure-f32 PyTorch-equivalent forward (loose tol
    # to absorb the intentional bf16 weight/activation quantization).
    h_f32 = x.reshape(B, -1) @ w1 + b1
    h_f32 = jnp.where(h_f32 > 0, h_f32, 0.01 * h_f32)
    out_f32 = h_f32 @ w2 + b2
    assert jnp.max(jnp.abs(out - out_f32)) < 5e-2

    print("KERNEL_OK")
</pallas_src>

<mosaic_0001>
module attributes {stable_mosaic.version = 11 : i64} {
  func.func @mlp_kernel(%arg0: i32, %arg1: memref<2x1024xbf16, #tpu.memory_space<vmem>>, %arg2: memref<1024x256xbf16, #tpu.memory_space<vmem>>, %arg3: memref<1x256xf32, #tpu.memory_space<vmem>>, %arg4: memref<256x32xbf16, #tpu.memory_space<vmem>>, %arg5: memref<1x32xf32, #tpu.memory_space<vmem>>, %arg6: memref<2x32xf32, #tpu.memory_space<vmem>>) attributes {dimension_semantics = [#tpu.dimension_semantics<parallel>], iteration_bounds = array<i64: 1>, scalar_prefetch = 0 : i64, scratch_operands = 0 : i64, tpu.core_type = #tpu.core_type<tc>, window_params = [{transform_indices = @transform_0, window_bounds = array<i64: 2, 1024>}, {pipeline_mode = #tpu.pipeline_mode<synchronous>, transform_indices = @transform_1, window_bounds = array<i64: 1024, 256>}, {pipeline_mode = #tpu.pipeline_mode<synchronous>, transform_indices = @transform_2, window_bounds = array<i64: 1, 256>}, {pipeline_mode = #tpu.pipeline_mode<synchronous>, transform_indices = @transform_3, window_bounds = array<i64: 256, 32>}, {pipeline_mode = #tpu.pipeline_mode<synchronous>, transform_indices = @transform_4, window_bounds = array<i64: 1, 32>}, {transform_indices = @transform_5, window_bounds = array<i64: 2, 32>}]} {
    %c0 = arith.constant 0 : index
    %c0_0 = arith.constant 0 : index
    %0 = vector.load %arg1[%c0, %c0_0] : memref<2x1024xbf16, #tpu.memory_space<vmem>>, vector<2x1024xbf16>
    %c0_1 = arith.constant 0 : index
    %c0_2 = arith.constant 0 : index
    %1 = vector.load %arg2[%c0_1, %c0_2] : memref<1024x256xbf16, #tpu.memory_space<vmem>>, vector<1024x256xbf16>
    %cst = arith.constant dense<0.000000e+00> : vector<2x256xf32>
    %2 = tpu.matmul %0, %1, %cst {dimension_numbers = #tpu.dot_dimension_numbers<[1], [0], [0], [1], [0, 0, 1, 1], [], []>} : vector<2x1024xbf16>, vector<1024x256xbf16>, vector<2x256xf32> -> vector<2x256xf32>
    %c0_3 = arith.constant 0 : index
    %c0_4 = arith.constant 0 : index
    %3 = vector.load %arg3[%c0_3, %c0_4] : memref<1x256xf32, #tpu.memory_space<vmem>>, vector<1x256xf32>
    %4 = vector.broadcast %3 : vector<1x256xf32> to vector<2x256xf32>
    %5 = arith.addf %2, %4 : vector<2x256xf32>
    %cst_5 = arith.constant 0.000000e+00 : f32
    %6 = vector.broadcast %cst_5 : f32 to vector<2x256xf32>
    %7 = arith.cmpf ogt, %5, %6 : vector<2x256xf32>
    %cst_6 = arith.constant 0.00999999977 : f32
    %8 = vector.broadcast %cst_6 : f32 to vector<2x256xf32>
    %9 = arith.mulf %8, %5 : vector<2x256xf32>
    %10 = arith.select %7, %5, %9 : vector<2x256xi1>, vector<2x256xf32>
    %11 = arith.truncf %10 : vector<2x256xf32> to vector<2x256xbf16>
    %c0_7 = arith.constant 0 : index
    %c0_8 = arith.constant 0 : index
    %12 = vector.load %arg4[%c0_7, %c0_8] : memref<256x32xbf16, #tpu.memory_space<vmem>>, vector<256x32xbf16>
    %cst_9 = arith.constant dense<0.000000e+00> : vector<2x32xf32>
    %13 = tpu.matmul %11, %12, %cst_9 {dimension_numbers = #tpu.dot_dimension_numbers<[1], [0], [0], [1], [0, 0, 1, 1], [], []>} : vector<2x256xbf16>, vector<256x32xbf16>, vector<2x32xf32> -> vector<2x32xf32>
    %c0_10 = arith.constant 0 : index
    %c0_11 = arith.constant 0 : index
    %14 = vector.load %arg5[%c0_10, %c0_11] : memref<1x32xf32, #tpu.memory_space<vmem>>, vector<1x32xf32>
    %15 = vector.broadcast %14 : vector<1x32xf32> to vector<2x32xf32>
    %16 = arith.addf %13, %15 : vector<2x32xf32>
    %c0_12 = arith.constant 0 : index
    %c0_13 = arith.constant 0 : index
    %17 = vector.load %arg6[%c0_12, %c0_13] : memref<2x32xf32, #tpu.memory_space<vmem>>, vector<2x32xf32>
    tpu.vector_store %arg6[%c0_12, %c0_13], %16 {strides = array<i32>} : memref<2x32xf32, #tpu.memory_space<vmem>>, vector<2x32xf32>,
    return
  }
  func.func @transform_0(%arg0: i32) -> (i32, i32) {
    %c0_i32 = arith.constant 0 : i32
    %c0_i32_0 = arith.constant 0 : i32
    return %arg0, %c0_i32 : i32, i32
  }
  func.func @transform_1(%arg0: i32) -> (i32, i32) {
    %c0_i32 = arith.constant 0 : i32
    %c0_i32_0 = arith.constant 0 : i32
    %c0_i32_1 = arith.constant 0 : i32
    return %c0_i32, %c0_i32_0 : i32, i32
  }
  func.func @transform_2(%arg0: i32) -> (i32, i32) {
    %c0_i32 = arith.constant 0 : i32
    %c0_i32_0 = arith.constant 0 : i32
    %c0_i32_1 = arith.constant 0 : i32
    return %c0_i32, %c0_i32_0 : i32, i32
  }
  func.func @transform_3(%arg0: i32) -> (i32, i32) {
    %c0_i32 = arith.constant 0 : i32
    %c0_i32_0 = arith.constant 0 : i32
    %c0_i32_1 = arith.constant 0 : i32
    return %c0_i32, %c0_i32_0 : i32, i32
  }
  func.func @transform_4(%arg0: i32) -> (i32, i32) {
    %c0_i32 = arith.constant 0 : i32
    %c0_i32_0 = arith.constant 0 : i32
    %c0_i32_1 = arith.constant 0 : i32
    return %c0_i32, %c0_i32_0 : i32, i32
  }
  func.func @transform_5(%arg0: i32) -> (i32, i32) {
    %c0_i32 = arith.constant 0 : i32
    %c0_i32_0 = arith.constant 0 : i32
    return %arg0, %c0_i32 : i32, i32
  }
}

</mosaic_0001>

<llo_original>
// kernel: tpu_custom_call.1
$region0: #{tpu_custom_call.1}
  #allocation0 [shape = 'u32[]', space=smem, size = 0x4, offset = 0x4, fixed_abs, tag = 'smem constant byte address 0x4 - core index']
  #allocation1 [shape = 'u32[144,128]{1,0:T(1,128)}', space=vmem, size = 0x12000, scoped, tag = 'internal scratch']
  %s0 = inlined_call_operand.vmem [shape: bf16[2,1024], index: 0, kind: input, shape index: {}]
  %s1 = inlined_call_operand.hbm [shape: bf16[1024,256], index: 1, kind: input, shape index: {}]
  %s2 = inlined_call_operand.vmem [shape: f32[1,256], index: 2, kind: input, shape index: {}]
  %s3 = inlined_call_operand.vmem [shape: bf16[256,32], index: 3, kind: input, shape index: {}]
  %s4 = inlined_call_operand.vmem [shape: f32[1,32], index: 4, kind: input, shape index: {}]
  %s5 = inlined_call_operand.hbm [shape: f32[2,32], index: 5, kind: output, shape index: {}]
  %s6 = sld [smem:[#allocation0]]
  $region34: #{tpu_custom_call.1} parent=0
    _
  %s8 = ssub.s32 1, %s6
  %s9 = scalar_select 0, %s8, %s6
  $region1: #{tpu_custom_call.1} parent=0
    #allocation2 [shape = 'u8[524288]{0}', space=vmem, size = 0x80000, scoped, tag = 'input window, operand 1, single buffered']
    #allocation3 [shape = 's32[1]{0}', space=sflag, size = 0x4, scoped, tag = 'scoped memory for tpu_custom_call.1']
    #allocation4 [shape = 's32[1]{0}', space=sflag, size = 0x4, scoped, tag = 'scoped memory for tpu_custom_call.1']
    #allocation5 [shape = 'u8[1024]{0}', space=vmem, size = 0x400, scoped, tag = 'output window, operand 0, single buffered']
    %10 = vsyncpa [#allocation3], 0
    %11 = vsyncpa [#allocation4], 0
    // Predicated region
    $region2: #{tpu_custom_call.1} parent=1 // pred_check
      _
    $region3: #{tpu_custom_call.1} parent=1 // pred_check_branch
      %13 = sbr.rel (0) target = $region5
    $region4: #{tpu_custom_call.1} parent=1 // pred_region
      _
    $region5: #{tpu_custom_call.1} parent=1 // pred_fallthru
      _
    // Predicated region
    $region6: #{tpu_custom_call.1} parent=1 // pred_check
      _
    $region7: #{tpu_custom_call.1} parent=1 // pred_check_branch
      %15 = sbr.rel (0) target = $region9
    $region8: #{tpu_custom_call.1} parent=1 // pred_region
      %s17 = ssub.s32 16384, 16384
      %18 = vsyncadd [#allocation3], %s17
      %s19 = sshll.u32 [#allocation2], 4
      %s20 = int_to_ptr.vmem [resolvable:$true] %s19
      %25 = dma.hbm_to_vmem [thread:$0]  %s1, 16384, %s20, [#allocation3], 128, 128, 8
    $region9: #{tpu_custom_call.1} parent=1 // pred_fallthru
      _
    // Predicated region
    $region10: #{tpu_custom_call.1} parent=1 // pred_check
      _
    $region11: #{tpu_custom_call.1} parent=1 // pred_check_branch
      %27 = sbr.rel (0) target = $region13
    $region12: #{tpu_custom_call.1} parent=1 // pred_region
      _
    $region13: #{tpu_custom_call.1} parent=1 // pred_fallthru
      _
    // Predicated region
    $region14: #{tpu_custom_call.1} parent=1 // pred_check
      _
    $region15: #{tpu_custom_call.1} parent=1 // pred_check_branch
      %29 = sbr.rel (0) target = $region17
    $region16: #{tpu_custom_call.1} parent=1 // pred_region
      _
    $region17: #{tpu_custom_call.1} parent=1 // pred_fallthru
      _
    // Predicated region
    $region18: #{tpu_custom_call.1} parent=1 // pred_check
      _
    $region19: #{tpu_custom_call.1} parent=1 // pred_check_branch
      %31 = sbr.rel (0) target = $region21
    $region20: #{tpu_custom_call.1} parent=1 // pred_region
      _
    $region21: #{tpu_custom_call.1} parent=1 // pred_fallthru
      _
    // Predicated region
    $region22: #{tpu_custom_call.1} parent=1 // pred_check
      _
    $region23: #{tpu_custom_call.1} parent=1 // pred_check_branch
      %33 = sbr.rel (0) target = $region25
    $region24: #{tpu_custom_call.1} parent=1 // pred_region
      %34 = dma.done [#allocation3], 16384
    $region25: #{tpu_custom_call.1} parent=1 // pred_fallthru
      _
    %v36 = vld [vmem:[%s0] sm:$0xff]
    %v37 = vld [vmem:[#allocation2] sm:$0xff]
    %v38 = vld [vmem:[#allocation2 + $0x8] sm:$0xff]
    %v39 = vld [vmem:[#allocation2 + $0x10] sm:$0xff]
    %v40 = vld [vmem:[#allocation2 + $0x18] sm:$0xff]
    %v41 = vld [vmem:[#allocation2 + $0x20] sm:$0xff]
    %v42 = vld [vmem:[#allocation2 + $0x28] sm:$0xff]
    %v43 = vld [vmem:[#allocation2 + $0x30] sm:$0xff]
    %v44 = vld [vmem:[#allocation2 + $0x38] sm:$0xff]
    %v45 = vld [vmem:[#allocation2 + $0x40] sm:$0xff]
    %v46 = vld [vmem:[#allocation2 + $0x48] sm:$0xff]
    %v47 = vld [vmem:[#allocation2 + $0x50] sm:$0xff]
    %v48 = vld [vmem:[#allocation2 + $0x58] sm:$0xff]
    %v49 = vld [vmem:[#allocation2 + $0x60] sm:$0xff]
    %v50 = vld [vmem:[#allocation2 + $0x68] sm:$0xff]
    %v51 = vld [vmem:[#allocation2 + $0x70] sm:$0xff]
    %v52 = vld [vmem:[#allocation2 + $0x78] sm:$0xff]
    %v53 = vld [vmem:[#allocation2 + $0x80] sm:$0xff]
    %v54 = vld [vmem:[#allocation2 + $0x88] sm:$0xff]
    %v55 = vld [vmem:[#allocation2 + $0x90] sm:$0xff]
    %v56 = vld [vmem:[#allocation2 + $0x98] sm:$0xff]
    %v57 = vld [vmem:[#allocation2 + $0xa0] sm:$0xff]
    %v58 = vld [vmem:[#allocation2 + $0xa8] sm:$0xff]
    %v59 = vld [vmem:[#allocation2 + $0xb0] sm:$0xff]
    %v60 = vld [vmem:[#allocation2 + $0xb8] sm:$0xff]
    %v61 = vld [vmem:[#allocation2 + $0xc0] sm:$0xff]
    %v62 = vld [vmem:[#allocation2 + $0xc8] sm:$0xff]
    %v63 = vld [vmem:[#allocation2 + $0xd0] sm:$0xff]
    %v64 = vld [vmem:[#allocation2 + $0xd8] sm:$0xff]
    %v65 = vld [vmem:[#allocation2 + $0xe0] sm:$0xff]
    %v66 = vld [vmem:[#allocation2 + $0xe8] sm:$0xff]
    %v67 = vld [vmem:[#allocation2 + $0xf0] sm:$0xff]
    %v68 = vld [vmem:[#allocation2 + $0xf8] sm:$0xff]
    %v69 = vld [vmem:[#allocation2 + $0x100] sm:$0xff]
    %v70 = vld [vmem:[#allocation2 + $0x108] sm:$0xff]
    %v71 = vld [vmem:[#allocation2 + $0x110] sm:$0xff]
    %v72 = vld [vmem:[#allocation2 + $0x118] sm:$0xff]
    %v73 = vld [vmem:[#allocation2 + $0x120] sm:$0xff]
    %v74 = vld [vmem:[#allocation2 + $0x128] sm:$0xff]
    %v75 = vld [vmem:[#allocation2 + $0x130] sm:$0xff]
    %v76 = vld [vmem:[#allocation2 + $0x138] sm:$0xff]
    %v77 = vld [vmem:[#allocation2 + $0x140] sm:$0xff]
    %v78 = vld [vmem:[#allocation2 + $0x148] sm:$0xff]
    %v79 = vld [vmem:[#allocation2 + $0x150] sm:$0xff]
    %v80 = vld [vmem:[#allocation2 + $0x158] sm:$0xff]
    %v81 = vld [vmem:[#allocation2 + $0x160] sm:$0xff]
    %v82 = vld [vmem:[#allocation2 + $0x168] sm:$0xff]
    %v83 = vld [vmem:[#allocation2 + $0x170] sm:$0xff]
    %v84 = vld [vmem:[#allocation2 + $0x178] sm:$0xff]
    %v85 = vld [vmem:[#allocation2 + $0x180] sm:$0xff]
    %v86 = vld [vmem:[#allocation2 + $0x188] sm:$0xff]
    %v87 = vld [vmem:[#allocation2 + $0x190] sm:$0xff]
    %v88 = vld [vmem:[#allocation2 + $0x198] sm:$0xff]
    %v89 = vld [vmem:[#allocation2 + $0x1a0] sm:$0xff]
    %v90 = vld [vmem:[#allocation2 + $0x1a8] sm:$0xff]
    %v91 = vld [vmem:[#allocation2 + $0x1b0] sm:$0xff]
    %v92 = vld [vmem:[#allocation2 + $0x1b8] sm:$0xff]
    %v93 = vld [vmem:[#allocation2 + $0x1c0] sm:$0xff]
    %v94 = vld [vmem:[#allocation2 + $0x1c8] sm:$0xff]
    %v95 = vld [vmem:[#allocation2 + $0x1d0] sm:$0xff]
    %v96 = vld [vmem:[#allocation2 + $0x1d8] sm:$0xff]
    %v97 = vld [vmem:[#allocation2 + $0x1e0] sm:$0xff]
    %v98 = vld [vmem:[#allocation2 + $0x1e8] sm:$0xff]
    %v99 = vld [vmem:[#allocation2 + $0x1f0] sm:$0xff]
    %v100 = vld [vmem:[#allocation2 + $0x1f8] sm:$0xff]
    %v101 = vld [vmem:[#allocation2 + $0x200] sm:$0xff]
    %v102 = vld [vmem:[#allocation2 + $0x208] sm:$0xff]
    %v103 = vld [vmem:[#allocation2 + $0x210] sm:$0xff]
    %v104 = vld [vmem:[#allocation2 + $0x218] sm:$0xff]
    %v105 = vld [vmem:[#allocation2 + $0x220] sm:$0xff]
    %v106 = vld [vmem:[#allocation2 + $0x228] sm:$0xff]
    %v107 = vld [vmem:[#allocation2 + $0x230] sm:$0xff]
    %v108 = vld [vmem:[#allocation2 + $0x238] sm:$0xff]
    %v109 = vld [vmem:[#allocation2 + $0x240] sm:$0xff]
    %v110 = vld [vmem:[#allocation2 + $0x248] sm:$0xff]
    %v111 = vld [vmem:[#allocation2 + $0x250] sm:$0xff]
    %v112 = vld [vmem:[#allocation2 + $0x258] sm:$0xff]
    %v113 = vld [vmem:[#allocation2 + $0x260] sm:$0xff]
    %v114 = vld [vmem:[#allocation2 + $0x268] sm:$0xff]
    %v115 = vld [vmem:[#allocation2 + $0x270] sm:$0xff]
    %v116 = vld [vmem:[#allocation2 + $0x278] sm:$0xff]
    %v117 = vld [vmem:[#allocation2 + $0x280] sm:$0xff]
    %v118 = vld [vmem:[#allocation2 + $0x288] sm:$0xff]
    %v119 = vld [vmem:[#allocation2 + $0x290] sm:$0xff]
    %v120 = vld [vmem:[#allocation2 + $0x298] sm:$0xff]
    %v121 = vld [vmem:[#allocation2 + $0x2a0] sm:$0xff]
    %v122 = vld [vmem:[#allocation2 + $0x2a8] sm:$0xff]
    %v123 = vld [vmem:[#allocation2 + $0x2b0] sm:$0xff]
    %v124 = vld [vmem:[#allocation2 + $0x2b8] sm:$0xff]
    %v125 = vld [vmem:[#allocation2 + $0x2c0] sm:$0xff]
    %v126 = vld [vmem:[#allocation2 + $0x2c8] sm:$0xff]
    %v127 = vld [vmem:[#allocation2 + $0x2d0] sm:$0xff]
    %v128 = vld [vmem:[#allocation2 + $0x2d8] sm:$0xff]
    %v129 = vld [vmem:[#allocation2 + $0x2e0] sm:$0xff]
    %v130 = vld [vmem:[#allocation2 + $0x2e8] sm:$0xff]
    %v131 = vld [vmem:[#allocation2 + $0x2f0] sm:$0xff]
    %v132 = vld [vmem:[#allocation2 + $0x2f8] sm:$0xff]
    %v133 = vld [vmem:[#allocation2 + $0x300] sm:$0xff]
    %v134 = vld [vmem:[#allocation2 + $0x308] sm:$0xff]
    %v135 = vld [vmem:[#allocation2 + $0x310] sm:$0xff]
    %v136 = vld [vmem:[#allocation2 + $0x318] sm:$0xff]
    %v137 = vld [vmem:[#allocation2 + $0x320] sm:$0xff]
    %v138 = vld [vmem:[#allocation2 + $0x328] sm:$0xff]
    %v139 = vld [vmem:[#allocation2 + $0x330] sm:$0xff]
    %v140 = vld [vmem:[#allocation2 + $0x338] sm:$0xff]
    %v141 = vld [vmem:[#allocation2 + $0x340] sm:$0xff]
    %v142 = vld [vmem:[#allocation2 + $0x348] sm:$0xff]
    %v143 = vld [vmem:[#allocation2 + $0x350] sm:$0xff]
    %v144 = vld [vmem:[#allocation2 + $0x358] sm:$0xff]
    %v145 = vld [vmem:[#allocation2 + $0x360] sm:$0xff]
    %v146 = vld [vmem:[#allocation2 + $0x368] sm:$0xff]
    %v147 = vld [vmem:[#allocation2 + $0x370] sm:$0xff]
    %v148 = vld [vmem:[#allocation2 + $0x378] sm:$0xff]
    %v149 = vld [vmem:[#allocation2 + $0x380] sm:$0xff]
    %v150 = vld [vmem:[#allocation2 + $0x388] sm:$0xff]
    %v151 = vld [vmem:[#allocation2 + $0x390] sm:$0xff]
    %v152 = vld [vmem:[#allocation2 + $0x398] sm:$0xff]
    %v153 = vld [vmem:[#allocation2 + $0x3a0] sm:$0xff]
    %v154 = vld [vmem:[#allocation2 + $0x3a8] sm:$0xff]
    %v155 = vld [vmem:[#allocation2 + $0x3b0] sm:$0xff]
    %v156 = vld [vmem:[#allocation2 + $0x3b8] sm:$0xff]
    %v157 = vld [vmem:[#allocation2 + $0x3c0] sm:$0xff]
    %v158 = vld [vmem:[#allocation2 + $0x3c8] sm:$0xff]
    %v159 = vld [vmem:[#allocation2 + $0x3d0] sm:$0xff]
    %v160 = vld [vmem:[#allocation2 + $0x3d8] sm:$0xff]
    %v161 = vld [vmem:[#allocation2 + $0x3e0] sm:$0xff]
    %v162 = vld [vmem:[#allocation2 + $0x3e8] sm:$0xff]
    %v163 = vld [vmem:[#allocation2 + $0x3f0] sm:$0xff]
    %v164 = vld [vmem:[#allocation2 + $0x3f8] sm:$0xff]
    %v165 = vld [vmem:[%s2] sm:$0x3]
    %v167 = vlaneseq
    %v168 = vshrl.u32 %v167, 7
    %v169 = vsub.s32 0, %v168
    %v170 = vrot.slane %v165, %v169
    %v171 = vlaneseq
    %v172 = vshrl.u32 %v171, 7
    %v173 = vsub.s32 1, %v172
    %v174 = vrot.slane %v165, %v173
    %v178 = vcombine.high %v36, %v36
    %v180 = vunpack.c.l.s4 1966171168
    %v181 = vunpack.c.0.s8 %v180
    %v182 = vlaneseq
    %v183 = vshrl.u32 %v182, 7
    %v184 = vsub.s32 %v181, %v183
    %v185 = vrot.slane %v36, %v184
    %v187 = vunpack.c.l.s4 1966171168
    %v188 = vunpack.c.0.s8 %v187
    %v189 = vlaneseq
    %v190 = vshrl.u32 %v189, 7
    %v191 = vsub.s32 %v188, %v190
    %v192 = vrot.slane %v178, %v191
    %v193 = vcombine.high %v185, %v185
    %v194 = vcombine.high %v192, %v192
    %v196 = vunpack.c.l.s4 1966171168
    %v197 = vunpack.c.0.s8 %v196
    %v198 = vlaneseq
    %v199 = vshrl.u32 %v198, 7
    %v200 = vsub.s32 %v197, %v199
    %v201 = vrot.slane %v185, %v200
    %v203 = vunpack.c.l.s4 1966171168
    %v204 = vunpack.c.0.s8 %v203
    %v205 = vlaneseq
    %v206 = vshrl.u32 %v205, 7
    %v207 = vsub.s32 %v204, %v206
    %v208 = vrot.slane %v192, %v207
    %v210 = vunpack.c.l.s4 1966171168
    %v211 = vunpack.c.0.s8 %v210
    %v212 = vlaneseq
    %v213 = vshrl.u32 %v212, 7
    %v214 = vsub.s32 %v211, %v213
    %v215 = vrot.slane %v193, %v214
    %v217 = vunpack.c.l.s4 1966171168
    %v218 = vunpack.c.0.s8 %v217
    %v219 = vlaneseq
    %v220 = vshrl.u32 %v219, 7
    %v221 = vsub.s32 %v218, %v220
    %v222 = vrot.slane %v194, %v221
    %v223 = vcombine.high %v201, %v201
    %v224 = vcombine.high %v208, %v208
    %v225 = vcombine.high %v215, %v215
    %v226 = vcombine.high %v222, %v222
    %v363 = vunpack.c.l.b16 %v37
    %v364 = vunpack.c.h.b16 %v37
    %v365 = vunpack.c.l.b16 %v38
    %v366 = vunpack.c.h.b16 %v38
    %v367 = vunpack.c.l.b16 %v39
    %v368 = vunpack.c.h.b16 %v39
    %v369 = vunpack.c.l.b16 %v40
    %v370 = vunpack.c.h.b16 %v40
    %v371 = vunpack.c.l.b16 %v41
    %v372 = vunpack.c.h.b16 %v41
    %v373 = vunpack.c.l.b16 %v42
    %v374 = vunpack.c.h.b16 %v42
    %v375 = vunpack.c.l.b16 %v43
    %v376 = vunpack.c.h.b16 %v43
    %v377 = vunpack.c.l.b16 %v44
    %v378 = vunpack.c.h.b16 %v44
    %v379 = vunpack.c.l.b16 %v45
    %v380 = vunpack.c.h.b16 %v45
    %v381 = vunpack.c.l.b16 %v46
    %v382 = vunpack.c.h.b16 %v46
    %v383 = vunpack.c.l.b16 %v47
    %v384 = vunpack.c.h.b16 %v47
    %v385 = vunpack.c.l.b16 %v48
    %v386 = vunpack.c.h.b16 %v48
    %v387 = vunpack.c.l.b16 %v49
    %v388 = vunpack.c.h.b16 %v49
    %v389 = vunpack.c.l.b16 %v50
    %v390 = vunpack.c.h.b16 %v50
    %v391 = vunpack.c.l.b16 %v51
    %v392 = vunpack.c.h.b16 %v51
    %v393 = vunpack.c.l.b16 %v52
    %v394 = vunpack.c.h.b16 %v52
    %v395 = vunpack.c.l.b16 %v53
    %v396 = vunpack.c.h.b16 %v53
    %v397 = vunpack.c.l.b16 %v54
    %v398 = vunpack.c.h.b16 %v54
    %v399 = vunpack.c.l.b16 %v55
    %v400 = vunpack.c.h.b16 %v55
    %v401 = vunpack.c.l.b16 %v56
    %v402 = vunpack.c.h.b16 %v56
    %v403 = vunpack.c.l.b16 %v57
    %v404 = vunpack.c.h.b16 %v57
    %v405 = vunpack.c.l.b16 %v58
    %v406 = vunpack.c.h.b16 %v58
    %v407 = vunpack.c.l.b16 %v59
    %v408 = vunpack.c.h.b16 %v59
    %v409 = vunpack.c.l.b16 %v60
    %v410 = vunpack.c.h.b16 %v60
    %v411 = vunpack.c.l.b16 %v61
    %v412 = vunpack.c.h.b16 %v61
    %v413 = vunpack.c.l.b16 %v62
    %v414 = vunpack.c.h.b16 %v62
    %v415 = vunpack.c.l.b16 %v63
    %v416 = vunpack.c.h.b16 %v63
    %v417 = vunpack.c.l.b16 %v64
    %v418 = vunpack.c.h.b16 %v64
    %v419 = vunpack.c.l.b16 %v65
    %v420 = vunpack.c.h.b16 %v65
    %v421 = vunpack.c.l.b16 %v66
    %v422 = vunpack.c.h.b16 %v66
    %v423 = vunpack.c.l.b16 %v67
    %v424 = vunpack.c.h.b16 %v67
    %v425 = vunpack.c.l.b16 %v68
    %v426 = vunpack.c.h.b16 %v68
    %v427 = vunpack.c.l.b16 %v69
    %v428 = vunpack.c.h.b16 %v69
    %v429 = vunpack.c.l.b16 %v70
    %v430 = vunpack.c.h.b16 %v70
    %v431 = vunpack.c.l.b16 %v71
    %v432 = vunpack.c.h.b16 %v71
    %v433 = vunpack.c.l.b16 %v72
    %v434 = vunpack.c.h.b16 %v72
    %v435 = vunpack.c.l.b16 %v73
    %v436 = vunpack.c.h.b16 %v73
    %v437 = vunpack.c.l.b16 %v74
    %v438 = vunpack.c.h.b16 %v74
    %v439 = vunpack.c.l.b16 %v75
    %v440 = vunpack.c.h.b16 %v75
    %v441 = vunpack.c.l.b16 %v76
    %v442 = vunpack.c.h.b16 %v76
    %v443 = vunpack.c.l.b16 %v77
    %v444 = vunpack.c.h.b16 %v77
    %v445 = vunpack.c.l.b16 %v78
    %v446 = vunpack.c.h.b16 %v78
    %v447 = vunpack.c.l.b16 %v79
    %v448 = vunpack.c.h.b16 %v79
    %v449 = vunpack.c.l.b16 %v80
    %v450 = vunpack.c.h.b16 %v80
    %v451 = vunpack.c.l.b16 %v81
    %v452 = vunpack.c.h.b16 %v81
    %v453 = vunpack.c.l.b16 %v82
    %v454 = vunpack.c.h.b16 %v82
    %v455 = vunpack.c.l.b16 %v83
    %v456 = vunpack.c.h.b16 %v83
    %v457 = vunpack.c.l.b16 %v84
    %v458 = vunpack.c.h.b16 %v84
    %v459 = vunpack.c.l.b16 %v85
    %v460 = vunpack.c.h.b16 %v85
    %v461 = vunpack.c.l.b16 %v86
    %v462 = vunpack.c.h.b16 %v86
    %v463 = vunpack.c.l.b16 %v87
    %v464 = vunpack.c.h.b16 %v87
    %v465 = vunpack.c.l.b16 %v88
    %v466 = vunpack.c.h.b16 %v88
    %v467 = vunpack.c.l.b16 %v89
    %v468 = vunpack.c.h.b16 %v89
    %v469 = vunpack.c.l.b16 %v90
    %v470 = vunpack.c.h.b16 %v90
    %v471 = vunpack.c.l.b16 %v91
    %v472 = vunpack.c.h.b16 %v91
    %v473 = vunpack.c.l.b16 %v92
    %v474 = vunpack.c.h.b16 %v92
    %v475 = vunpack.c.l.b16 %v93
    %v476 = vunpack.c.h.b16 %v93
    %v477 = vunpack.c.l.b16 %v94
    %v478 = vunpack.c.h.b16 %v94
    %v479 = vunpack.c.l.b16 %v95
    %v480 = vunpack.c.h.b16 %v95
    %v481 = vunpack.c.l.b16 %v96
    %v482 = vunpack.c.h.b16 %v96
    %v483 = vunpack.c.l.b16 %v97
    %v484 = vunpack.c.h.b16 %v97
    %v485 = vunpack.c.l.b16 %v98
    %v486 = vunpack.c.h.b16 %v98
    %v487 = vunpack.c.l.b16 %v99
    %v488 = vunpack.c.h.b16 %v99
    %v489 = vunpack.c.l.b16 %v100
    %v490 = vunpack.c.h.b16 %v100
    %v491 = vunpack.c.l.b16 %v101
    %v492 = vunpack.c.h.b16 %v101
    %v493 = vunpack.c.l.b16 %v102
    %v494 = vunpack.c.h.b16 %v102
    %v495 = vunpack.c.l.b16 %v103
    %v496 = vunpack.c.h.b16 %v103
    %v497 = vunpack.c.l.b16 %v104
    %v498 = vunpack.c.h.b16 %v104
    %v499 = vunpack.c.l.b16 %v105
    %v500 = vunpack.c.h.b16 %v105
    %v501 = vunpack.c.l.b16 %v106
    %v502 = vunpack.c.h.b16 %v106
    %v503 = vunpack.c.l.b16 %v107
    %v504 = vunpack.c.h.b16 %v107
    %v505 = vunpack.c.l.b16 %v108
    %v506 = vunpack.c.h.b16 %v108
    %v507 = vunpack.c.l.b16 %v109
    %v508 = vunpack.c.h.b16 %v109
    %v509 = vunpack.c.l.b16 %v110
    %v510 = vunpack.c.h.b16 %v110
    %v511 = vunpack.c.l.b16 %v111
    %v512 = vunpack.c.h.b16 %v111
    %v513 = vunpack.c.l.b16 %v112
    %v514 = vunpack.c.h.b16 %v112
    %v515 = vunpack.c.l.b16 %v113
    %v516 = vunpack.c.h.b16 %v113
    %v517 = vunpack.c.l.b16 %v114
    %v518 = vunpack.c.h.b16 %v114
    %v519 = vunpack.c.l.b16 %v115
    %v520 = vunpack.c.h.b16 %v115
    %v521 = vunpack.c.l.b16 %v116
    %v522 = vunpack.c.h.b16 %v116
    %v523 = vunpack.c.l.b16 %v117
    %v524 = vunpack.c.h.b16 %v117
    %v525 = vunpack.c.l.b16 %v118
    %v526 = vunpack.c.h.b16 %v118
    %v527 = vunpack.c.l.b16 %v119
    %v528 = vunpack.c.h.b16 %v119
    %v529 = vunpack.c.l.b16 %v120
    %v530 = vunpack.c.h.b16 %v120
    %v531 = vunpack.c.l.b16 %v121
    %v532 = vunpack.c.h.b16 %v121
    %v533 = vunpack.c.l.b16 %v122
    %v534 = vunpack.c.h.b16 %v122
    %v535 = vunpack.c.l.b16 %v123
    %v536 = vunpack.c.h.b16 %v123
    %v537 = vunpack.c.l.b16 %v124
    %v538 = vunpack.c.h.b16 %v124
    %v539 = vunpack.c.l.b16 %v125
    %v540 = vunpack.c.h.b16 %v125
    %v541 = vunpack.c.l.b16 %v126
    %v542 = vunpack.c.h.b16 %v126
    %v543 = vunpack.c.l.b16 %v127
    %v544 = vunpack.c.h.b16 %v127
    %v545 = vunpack.c.l.b16 %v128
    %v546 = vunpack.c.h.b16 %v128
    %v547 = vunpack.c.l.b16 %v129
    %v548 = vunpack.c.h.b16 %v129
    %v549 = vunpack.c.l.b16 %v130
    %v550 = vunpack.c.h.b16 %v130
    %v551 = vunpack.c.l.b16 %v131
    %v552 = vunpack.c.h.b16 %v131
    %v553 = vunpack.c.l.b16 %v132
    %v554 = vunpack.c.h.b16 %v132
    %v555 = vunpack.c.l.b16 %v133
    %v556 = vunpack.c.h.b16 %v133
    %v557 = vunpack.c.l.b16 %v134
    %v558 = vunpack.c.h.b16 %v134
    %v559 = vunpack.c.l.b16 %v135
    %v560 = vunpack.c.h.b16 %v135
    %v561 = vunpack.c.l.b16 %v136
    %v562 = vunpack.c.h.b16 %v136
    %v563 = vunpack.c.l.b16 %v137
    %v564 = vunpack.c.h.b16 %v137
    %v565 = vunpack.c.l.b16 %v138
    %v566 = vunpack.c.h.b16 %v138
    %v567 = vunpack.c.l.b16 %v139
    %v568 = vunpack.c.h.b16 %v139
    %v569 = vunpack.c.l.b16 %v140
    %v570 = vunpack.c.h.b16 %v140
    %v571 = vunpack.c.l.b16 %v141
    %v572 = vunpack.c.h.b16 %v141
    %v573 = vunpack.c.l.b16 %v142
    %v574 = vunpack.c.h.b16 %v142
    %v575 = vunpack.c.l.b16 %v143
    %v576 = vunpack.c.h.b16 %v143
    %v577 = vunpack.c.l.b16 %v144
    %v578 = vunpack.c.h.b16 %v144
    %v579 = vunpack.c.l.b16 %v145
    %v580 = vunpack.c.h.b16 %v145
    %v581 = vunpack.c.l.b16 %v146
    %v582 = vunpack.c.h.b16 %v146
    %v583 = vunpack.c.l.b16 %v147
    %v584 = vunpack.c.h.b16 %v147
    %v585 = vunpack.c.l.b16 %v148
    %v586 = vunpack.c.h.b16 %v148
    %v587 = vunpack.c.l.b16 %v149
    %v588 = vunpack.c.h.b16 %v149
    %v589 = vunpack.c.l.b16 %v150
    %v590 = vunpack.c.h.b16 %v150
    %v591 = vunpack.c.l.b16 %v151
    %v592 = vunpack.c.h.b16 %v151
    %v593 = vunpack.c.l.b16 %v152
    %v594 = vunpack.c.h.b16 %v152
    %v595 = vunpack.c.l.b16 %v153
    %v596 = vunpack.c.h.b16 %v153
    %v597 = vunpack.c.l.b16 %v154
    %v598 = vunpack.c.h.b16 %v154
    %v599 = vunpack.c.l.b16 %v155
    %v600 = vunpack.c.h.b16 %v155
    %v601 = vunpack.c.l.b16 %v156
    %v602 = vunpack.c.h.b16 %v156
    %v603 = vunpack.c.l.b16 %v157
    %v604 = vunpack.c.h.b16 %v157
    %v605 = vunpack.c.l.b16 %v158
    %v606 = vunpack.c.h.b16 %v158
    %v607 = vunpack.c.l.b16 %v159
    %v608 = vunpack.c.h.b16 %v159
    %v609 = vunpack.c.l.b16 %v160
    %v610 = vunpack.c.h.b16 %v160
    %v611 = vunpack.c.l.b16 %v161
    %v612 = vunpack.c.h.b16 %v161
    %v613 = vunpack.c.l.b16 %v162
    %v614 = vunpack.c.h.b16 %v162
    %v615 = vunpack.c.l.b16 %v163
    %v616 = vunpack.c.h.b16 %v163
    %v617 = vunpack.c.l.b16 %v164
    %v618 = vunpack.c.h.b16 %v164
    %v619 = vpack.c.b16 %v365, %v363
    %v620 = vpack.c.b16 %v366, %v364
    %v621 = vpack.c.b16 %v369, %v367
    %v622 = vpack.c.b16 %v370, %v368
    %v623 = vpack.c.b16 %v373, %v371
    %v624 = vpack.c.b16 %v374, %v372
    %v625 = vpack.c.b16 %v377, %v375
    %v626 = vpack.c.b16 %v378, %v376
    %v627 = vpack.c.b16 %v381, %v379
    %v628 = vpack.c.b16 %v382, %v380
    %v629 = vpack.c.b16 %v385, %v383
    %v630 = vpack.c.b16 %v386, %v384
    %v631 = vpack.c.b16 %v389, %v387
    %v632 = vpack.c.b16 %v390, %v388
    %v633 = vpack.c.b16 %v393, %v391
    %v634 = vpack.c.b16 %v394, %v392
    %v635 = vpack.c.b16 %v397, %v395
    %v636 = vpack.c.b16 %v398, %v396
    %v637 = vpack.c.b16 %v401, %v399
    %v638 = vpack.c.b16 %v402, %v400
    %v639 = vpack.c.b16 %v405, %v403
    %v640 = vpack.c.b16 %v406, %v404
    %v641 = vpack.c.b16 %v409, %v407
    %v642 = vpack.c.b16 %v410, %v408
    %v643 = vpack.c.b16 %v413, %v411
    %v644 = vpack.c.b16 %v414, %v412
    %v645 = vpack.c.b16 %v417, %v415
    %v646 = vpack.c.b16 %v418, %v416
    %v647 = vpack.c.b16 %v421, %v419
    %v648 = vpack.c.b16 %v422, %v420
    %v649 = vpack.c.b16 %v425, %v423
    %v650 = vpack.c.b16 %v426, %v424
    %v651 = vpack.c.b16 %v429, %v427
    %v652 = vpack.c.b16 %v430, %v428
    %v653 = vpack.c.b16 %v433, %v431
    %v654 = vpack.c.b16 %v434, %v432
    %v655 = vpack.c.b16 %v437, %v435
    %v656 = vpack.c.b16 %v438, %v436
    %v657 = vpack.c.b16 %v441, %v439
    %v658 = vpack.c.b16 %v442, %v440
    %v659 = vpack.c.b16 %v445, %v443
    %v660 = vpack.c.b16 %v446, %v444
    %v661 = vpack.c.b16 %v449, %v447
    %v662 = vpack.c.b16 %v450, %v448
    %v663 = vpack.c.b16 %v453, %v451
    %v664 = vpack.c.b16 %v454, %v452
    %v665 = vpack.c.b16 %v457, %v455
    %v666 = vpack.c.b16 %v458, %v456
    %v667 = vpack.c.b16 %v461, %v459
    %v668 = vpack.c.b16 %v462, %v460
    %v669 = vpack.c.b16 %v465, %v463
    %v670 = vpack.c.b16 %v466, %v464
    %v671 = vpack.c.b16 %v469, %v467
    %v672 = vpack.c.b16 %v470, %v468
    %v673 = vpack.c.b16 %v473, %v471
    %v674 = vpack.c.b16 %v474, %v472
    %v675 = vpack.c.b16 %v477, %v475
    %v676 = vpack.c.b16 %v478, %v476
    %v677 = vpack.c.b16 %v481, %v479
    %v678 = vpack.c.b16 %v482, %v480
    %v679 = vpack.c.b16 %v485, %v483
    %v680 = vpack.c.b16 %v486, %v484
    %v681 = vpack.c.b16 %v489, %v487
    %v682 = vpack.c.b16 %v490, %v488
    %v683 = vpack.c.b16 %v493, %v491
    %v684 = vpack.c.b16 %v494, %v492
    %v685 = vpack.c.b16 %v497, %v495
    %v686 = vpack.c.b16 %v498, %v496
    %v687 = vpack.c.b16 %v501, %v499
    %v688 = vpack.c.b16 %v502, %v500
    %v689 = vpack.c.b16 %v505, %v503
    %v690 = vpack.c.b16 %v506, %v504
    %v691 = vpack.c.b16 %v509, %v507
    %v692 = vpack.c.b16 %v510, %v508
    %v693 = vpack.c.b16 %v513, %v511
    %v694 = vpack.c.b16 %v514, %v512
    %v695 = vpack.c.b16 %v517, %v515
    %v696 = vpack.c.b16 %v518, %v516
    %v697 = vpack.c.b16 %v521, %v519
    %v698 = vpack.c.b16 %v522, %v520
    %v699 = vpack.c.b16 %v525, %v523
    %v700 = vpack.c.b16 %v526, %v524
    %v701 = vpack.c.b16 %v529, %v527
    %v702 = vpack.c.b16 %v530, %v528
    %v703 = vpack.c.b16 %v533, %v531
    %v704 = vpack.c.b16 %v534, %v532
    %v705 = vpack.c.b16 %v537, %v535
    %v706 = vpack.c.b16 %v538, %v536
    %v707 = vpack.c.b16 %v541, %v539
    %v708 = vpack.c.b16 %v542, %v540
    %v709 = vpack.c.b16 %v545, %v543
    %v710 = vpack.c.b16 %v546, %v544
    %v711 = vpack.c.b16 %v549, %v547
    %v712 = vpack.c.b16 %v550, %v548
    %v713 = vpack.c.b16 %v553, %v551
    %v714 = vpack.c.b16 %v554, %v552
    %v715 = vpack.c.b16 %v557, %v555
    %v716 = vpack.c.b16 %v558, %v556
    %v717 = vpack.c.b16 %v561, %v559
    %v718 = vpack.c.b16 %v562, %v560
    %v719 = vpack.c.b16 %v565, %v563
    %v720 = vpack.c.b16 %v566, %v564
    %v721 = vpack.c.b16 %v569, %v567
    %v722 = vpack.c.b16 %v570, %v568
    %v723 = vpack.c.b16 %v573, %v571
    %v724 = vpack.c.b16 %v574, %v572
    %v725 = vpack.c.b16 %v577, %v575
    %v726 = vpack.c.b16 %v578, %v576
    %v727 = vpack.c.b16 %v581, %v579
    %v728 = vpack.c.b16 %v582, %v580
    %v729 = vpack.c.b16 %v585, %v583
    %v730 = vpack.c.b16 %v586, %v584
    %v731 = vpack.c.b16 %v589, %v587
    %v732 = vpack.c.b16 %v590, %v588
    %v733 = vpack.c.b16 %v593, %v591
    %v734 = vpack.c.b16 %v594, %v592
    %v735 = vpack.c.b16 %v597, %v595
    %v736 = vpack.c.b16 %v598, %v596
    %v737 = vpack.c.b16 %v601, %v599
    %v738 = vpack.c.b16 %v602, %v600
    %v739 = vpack.c.b16 %v605, %v603
    %v740 = vpack.c.b16 %v606, %v604
    %v741 = vpack.c.b16 %v609, %v607
    %v742 = vpack.c.b16 %v610, %v608
    %v743 = vpack.c.b16 %v613, %v611
    %v744 = vpack.c.b16 %v614, %v612
    %v745 = vpack.c.b16 %v617, %v615
    %v746 = vpack.c.b16 %v618, %v616
    %875 = vmatprep.subr.bf16.mxu0 %v620
    %876 = vmatpush1.bf16.msra.mxu0 %v619
    %877 = vmatprep.subr.bf16.mxu0 %v622
    %878 = vmatpush1.bf16.msra.mxu0 %v621
    %879 = vmatprep.subr.bf16.mxu0 %v624
    %880 = vmatpush1.bf16.msra.mxu0 %v623
    %881 = vmatprep.subr.bf16.mxu0 %v626
    %882 = vmatpush1.bf16.msra.mxu0 %v625
    %883 = vmatprep.subr.bf16.mxu0 %v628
    %884 = vmatpush1.bf16.msra.mxu0 %v627
    %885 = vmatprep.subr.bf16.mxu0 %v630
    %886 = vmatpush1.bf16.msra.mxu0 %v629
    %887 = vmatprep.subr.bf16.mxu0 %v632
    %888 = vmatpush1.bf16.msra.mxu0 %v631
    %889 = vmatprep.subr.bf16.mxu0 %v634
    %890 = vmatpush1.bf16.msra.mxu0 %v633
    %891 = vmatprep.subr.bf16.mxu0 %v636
    %892 = vmatpush1.bf16.msra.mxu0 %v635
    %893 = vmatprep.subr.bf16.mxu0 %v638
    %894 = vmatpush1.bf16.msra.mxu0 %v637
    %895 = vmatprep.subr.bf16.mxu0 %v640
    %896 = vmatpush1.bf16.msra.mxu0 %v639
    %897 = vmatprep.subr.bf16.mxu0 %v642
    %898 = vmatpush1.bf16.msra.mxu0 %v641
    %899 = vmatprep.subr.bf16.mxu0 %v644
    %900 = vmatpush1.bf16.msra.mxu0 %v643
    %901 = vmatprep.subr.bf16.mxu0 %v646
    %902 = vmatpush1.bf16.msra.mxu0 %v645
    %903 = vmatprep.subr.bf16.mxu0 %v648
    %904 = vmatpush1.bf16.msra.mxu0 %v647
    %905 = vmatprep.subr.bf16.mxu0 %v650
    %906 = vmatpush1.bf16.msra.mxu0 %v649
    %907 = vmatprep.mubr.bf16.mxu0 %v215
    %908 = vmatmul.mubr.bf16.gmra.mrb[0].mxu0 %v201
    %v909 = vpop.f32.mrb[0].mxu0
    %v910 = vadd.f32 %v170, %v909
    %v911 = vpop.f32.mrb[0].mxu0
    %v912 = vadd.f32 %v174, %v911
    %v913 = vpop.f32.mrb[0].mxu0
    %v914 = vpop.f32.mrb[0].mxu0
    %915 = vdwg.mxu0
    %916 = vmatprep.subr.bf16.mxu0 %v652
    %917 = vmatpush1.bf16.msra.mxu0 %v651
    %918 = vmatprep.subr.bf16.mxu0 %v654
    %919 = vmatpush1.bf16.msra.mxu0 %v653
    %920 = vmatprep.subr.bf16.mxu0 %v656
    %921 = vmatpush1.bf16.msra.mxu0 %v655
    %922 = vmatprep.subr.bf16.mxu0 %v658
    %923 = vmatpush1.bf16.msra.mxu0 %v657
    %924 = vmatprep.subr.bf16.mxu0 %v660
    %925 = vmatpush1.bf16.msra.mxu0 %v659
    %926 = vmatprep.subr.bf16.mxu0 %v662
    %927 = vmatpush1.bf16.msra.mxu0 %v661
    %928 = vmatprep.subr.bf16.mxu0 %v664
    %929 = vmatpush1.bf16.msra.mxu0 %v663
    %930 = vmatprep.subr.bf16.mxu0 %v666
    %931 = vmatpush1.bf16.msra.mxu0 %v665
    %932 = vmatprep.subr.bf16.mxu0 %v668
    %933 = vmatpush1.bf16.msra.mxu0 %v667
    %934 = vmatprep.subr.bf16.mxu0 %v670
    %935 = vmatpush1.bf16.msra.mxu0 %v669
    %936 = vmatprep.subr.bf16.mxu0 %v672
    %937 = vmatpush1.bf16.msra.mxu0 %v671
    %938 = vmatprep.subr.bf16.mxu0 %v674
    %939 = vmatpush1.bf16.msra.mxu0 %v673
    %940 = vmatprep.subr.bf16.mxu0 %v676
    %941 = vmatpush1.bf16.msra.mxu0 %v675
    %942 = vmatprep.subr.bf16.mxu0 %v678
    %943 = vmatpush1.bf16.msra.mxu0 %v677
    %944 = vmatprep.subr.bf16.mxu0 %v680
    %945 = vmatpush1.bf16.msra.mxu0 %v679
    %946 = vmatprep.subr.bf16.mxu0 %v682
    %947 = vmatpush1.bf16.msra.mxu0 %v681
    %948 = vmatprep.mubr.bf16.mxu0 %v225
    %949 = vmatmul.mubr.bf16.gmra.mrb[0].mxu0 %v223
    %v950 = vpop.f32.mrb[0].mxu0
    %v951 = vadd.f32 %v910, %v950
    %v952 = vpop.f32.mrb[0].mxu0
    %v953 = vadd.f32 %v912, %v952
    %v954 = vpop.f32.mrb[0].mxu0
    %v955 = vpop.f32.mrb[0].mxu0
    %956 = vdwg.mxu0
    %957 = vmatprep.subr.bf16.mxu0 %v684
    %958 = vmatpush1.bf16.msra.mxu0 %v683
    %959 = vmatprep.subr.bf16.mxu0 %v686
    %960 = vmatpush1.bf16.msra.mxu0 %v685
    %961 = vmatprep.subr.bf16.mxu0 %v688
    %962 = vmatpush1.bf16.msra.mxu0 %v687
    %963 = vmatprep.subr.bf16.mxu0 %v690
    %964 = vmatpush1.bf16.msra.mxu0 %v689
    %965 = vmatprep.subr.bf16.mxu0 %v692
    %966 = vmatpush1.bf16.msra.mxu0 %v691
    %967 = vmatprep.subr.bf16.mxu0 %v694
    %968 = vmatpush1.bf16.msra.mxu0 %v693
    %969 = vmatprep.subr.bf16.mxu0 %v696
    %970 = vmatpush1.bf16.msra.mxu0 %v695
    %971 = vmatprep.subr.bf16.mxu0 %v698
    %972 = vmatpush1.bf16.msra.mxu0 %v697
    %973 = vmatprep.subr.bf16.mxu0 %v700
    %974 = vmatpush1.bf16.msra.mxu0 %v699
    %975 = vmatprep.subr.bf16.mxu0 %v702
    %976 = vmatpush1.bf16.msra.mxu0 %v701
    %977 = vmatprep.subr.bf16.mxu0 %v704
    %978 = vmatpush1.bf16.msra.mxu0 %v703
    %979 = vmatprep.subr.bf16.mxu0 %v706
    %980 = vmatpush1.bf16.msra.mxu0 %v705
    %981 = vmatprep.subr.bf16.mxu0 %v708
    %982 = vmatpush1.bf16.msra.mxu0 %v707
    %983 = vmatprep.subr.bf16.mxu0 %v710
    %984 = vmatpush1.bf16.msra.mxu0 %v709
    %985 = vmatprep.subr.bf16.mxu0 %v712
    %986 = vmatpush1.bf16.msra.mxu0 %v711
    %987 = vmatprep.subr.bf16.mxu0 %v714
    %988 = vmatpush1.bf16.msra.mxu0 %v713
    %989 = vmatprep.mubr.bf16.mxu0 %v222
    %990 = vmatmul.mubr.bf16.gmra.mrb[0].mxu0 %v208
    %v991 = vpop.f32.mrb[0].mxu0
    %v992 = vadd.f32 %v951, %v991
    %v993 = vpop.f32.mrb[0].mxu0
    %v994 = vadd.f32 %v953, %v993
    %v995 = vpop.f32.mrb[0].mxu0
    %v996 = vpop.f32.mrb[0].mxu0
    %997 = vdwg.mxu0
    %998 = vmatprep.subr.bf16.mxu0 %v716
    %999 = vmatpush1.bf16.msra.mxu0 %v715
    %1000 = vmatprep.subr.bf16.mxu0 %v718
    %1001 = vmatpush1.bf16.msra.mxu0 %v717
    %1002 = vmatprep.subr.bf16.mxu0 %v720
    %1003 = vmatpush1.bf16.msra.mxu0 %v719
    %1004 = vmatprep.subr.bf16.mxu0 %v722
    %1005 = vmatpush1.bf16.msra.mxu0 %v721
    %1006 = vmatprep.subr.bf16.mxu0 %v724
    %1007 = vmatpush1.bf16.msra.mxu0 %v723
    %1008 = vmatprep.subr.bf16.mxu0 %v726
    %1009 = vmatpush1.bf16.msra.mxu0 %v725
    %1010 = vmatprep.subr.bf16.mxu0 %v728
    %1011 = vmatpush1.bf16.msra.mxu0 %v727
    %1012 = vmatprep.subr.bf16.mxu0 %v730
    %1013 = vmatpush1.bf16.msra.mxu0 %v729
    %1014 = vmatprep.subr.bf16.mxu0 %v732
    %1015 = vmatpush1.bf16.msra.mxu0 %v731
    %1016 = vmatprep.subr.bf16.mxu0 %v734
    %1017 = vmatpush1.bf16.msra.mxu0 %v733
    %1018 = vmatprep.subr.bf16.mxu0 %v736
    %1019 = vmatpush1.bf16.msra.mxu0 %v735
    %1020 = vmatprep.subr.bf16.mxu0 %v738
    %1021 = vmatpush1.bf16.msra.mxu0 %v737
    %1022 = vmatprep.subr.bf16.mxu0 %v740
    %1023 = vmatpush1.bf16.msra.mxu0 %v739
    %1024 = vmatprep.subr.bf16.mxu0 %v742
    %1025 = vmatpush1.bf16.msra.mxu0 %v741
    %1026 = vmatprep.subr.bf16.mxu0 %v744
    %1027 = vmatpush1.bf16.msra.mxu0 %v743
    %1028 = vmatprep.subr.bf16.mxu0 %v746
    %1029 = vmatpush1.bf16.msra.mxu0 %v745
    %1030 = vmatprep.mubr.bf16.mxu0 %v226
    %1031 = vmatmul.mubr.bf16.gmra.mrb[0].mxu0 %v224
    %v1032 = vpop.f32.mrb[0].mxu0
    %v1033 = vadd.f32 %v992, %v1032
    %v1034 = vpop.f32.mrb[0].mxu0
    %v1035 = vadd.f32 %v994, %v1034
    %v1036 = vpop.f32.mrb[0].mxu0
    %v1037 = vpop.f32.mrb[0].mxu0
    %1038 = vdwg.mxu0
    %vm1039 = vcmp.gt.f32.partialorder %v1033, 0.0
    %vm1040 = vcmp.gt.f32.partialorder %v1035, 0.0
    %v1041 = vmul.f32 %v1033, 0.01
    %v1042 = vmul.f32 %v1035, 0.01
    %v1043 = vsel %vm1039, %v1033, %v1041
    %v1044 = vsel %vm1040, %v1035, %v1042
    %v1045 = vpack.c.bf16 %v1043, %v1043
    %v1046 = vpack.c.bf16 %v1044, %v1044
    %v1047 = vld [vmem:[%s3] sm:$0xf]
    %v1048 = vld [vmem:[%s3 + $0x4] sm:$0xf]
    %v1049 = vld [vmem:[%s3 + $0x8] sm:$0xf]
    %v1050 = vld [vmem:[%s3 + $0xc] sm:$0xf]
    %v1051 = vld [vmem:[%s3 + $0x10] sm:$0xf]
    %v1052 = vld [vmem:[%s3 + $0x14] sm:$0xf]
    %v1053 = vld [vmem:[%s3 + $0x18] sm:$0xf]
    %v1054 = vld [vmem:[%s3 + $0x1c] sm:$0xf]
    %v1055 = vld [vmem:[%s3 + $0x20] sm:$0xf]
    %v1056 = vld [vmem:[%s3 + $0x24] sm:$0xf]
    %v1057 = vld [vmem:[%s3 + $0x28] sm:$0xf]
    %v1058 = vld [vmem:[%s3 + $0x2c] sm:$0xf]
    %v1059 = vld [vmem:[%s3 + $0x30] sm:$0xf]
    %v1060 = vld [vmem:[%s3 + $0x34] sm:$0xf]
    %v1061 = vld [vmem:[%s3 + $0x38] sm:$0xf]
    %v1062 = vld [vmem:[%s3 + $0x3c] sm:$0xf]
    %v1063 = vld [vmem:[%s3 + $0x40] sm:$0xf]
    %v1064 = vld [vmem:[%s3 + $0x44] sm:$0xf]
    %v1065 = vld [vmem:[%s3 + $0x48] sm:$0xf]
    %v1066 = vld [vmem:[%s3 + $0x4c] sm:$0xf]
    %v1067 = vld [vmem:[%s3 + $0x50] sm:$0xf]
    %v1068 = vld [vmem:[%s3 + $0x54] sm:$0xf]
    %v1069 = vld [vmem:[%s3 + $0x58] sm:$0xf]
    %v1070 = vld [vmem:[%s3 + $0x5c] sm:$0xf]
    %v1071 = vld [vmem:[%s3 + $0x60] sm:$0xf]
    %v1072 = vld [vmem:[%s3 + $0x64] sm:$0xf]
    %v1073 = vld [vmem:[%s3 + $0x68] sm:$0xf]
    %v1074 = vld [vmem:[%s3 + $0x6c] sm:$0xf]
    %v1075 = vld [vmem:[%s3 + $0x70] sm:$0xf]
    %v1076 = vld [vmem:[%s3 + $0x74] sm:$0xf]
    %v1077 = vld [vmem:[%s3 + $0x78] sm:$0xf]
    %v1078 = vld [vmem:[%s3 + $0x7c] sm:$0xf]
    %v1079 = vld [vmem:[%s4] sm:$0x1]
    %v1081 = vlaneseq
    %v1082 = vshrl.u32 %v1081, 7
    %v1083 = vsub.s32 0, %v1082
    %v1084 = vrot.slane %v1079, %v1083
    %v1118 = vunpack.c.l.b16 %v1047
    %v1119 = vunpack.c.l.b16 %v1048
    %v1120 = vunpack.c.l.b16 %v1049
    %v1121 = vunpack.c.l.b16 %v1050
    %v1122 = vunpack.c.l.b16 %v1051
    %v1123 = vunpack.c.l.b16 %v1052
    %v1124 = vunpack.c.l.b16 %v1053
    %v1125 = vunpack.c.l.b16 %v1054
    %v1126 = vunpack.c.l.b16 %v1055
    %v1127 = vunpack.c.l.b16 %v1056
    %v1128 = vunpack.c.l.b16 %v1057
    %v1129 = vunpack.c.l.b16 %v1058
    %v1130 = vunpack.c.l.b16 %v1059
    %v1131 = vunpack.c.l.b16 %v1060
    %v1132 = vunpack.c.l.b16 %v1061
    %v1133 = vunpack.c.l.b16 %v1062
    %v1134 = vunpack.c.l.b16 %v1063
    %v1135 = vunpack.c.l.b16 %v1064
    %v1136 = vunpack.c.l.b16 %v1065
    %v1137 = vunpack.c.l.b16 %v1066
    %v1138 = vunpack.c.l.b16 %v1067
    %v1139 = vunpack.c.l.b16 %v1068
    %v1140 = vunpack.c.l.b16 %v1069
    %v1141 = vunpack.c.l.b16 %v1070
    %v1142 = vunpack.c.l.b16 %v1071
    %v1143 = vunpack.c.l.b16 %v1072
    %v1144 = vunpack.c.l.b16 %v1073
    %v1145 = vunpack.c.l.b16 %v1074
    %v1146 = vunpack.c.l.b16 %v1075
    %v1147 = vunpack.c.l.b16 %v1076
    %v1148 = vunpack.c.l.b16 %v1077
    %v1149 = vunpack.c.l.b16 %v1078
    %v1150 = vpack.c.b16 %v1119, %v1118
    %v1151 = vpack.c.b16 %v1121, %v1120
    %v1152 = vpack.c.b16 %v1123, %v1122
    %v1153 = vpack.c.b16 %v1125, %v1124
    %v1154 = vpack.c.b16 %v1127, %v1126
    %v1155 = vpack.c.b16 %v1129, %v1128
    %v1156 = vpack.c.b16 %v1131, %v1130
    %v1157 = vpack.c.b16 %v1133, %v1132
    %v1158 = vpack.c.b16 %v1135, %v1134
    %v1159 = vpack.c.b16 %v1137, %v1136
    %v1160 = vpack.c.b16 %v1139, %v1138
    %v1161 = vpack.c.b16 %v1141, %v1140
    %v1162 = vpack.c.b16 %v1143, %v1142
    %v1163 = vpack.c.b16 %v1145, %v1144
    %v1164 = vpack.c.b16 %v1147, %v1146
    %v1165 = vpack.c.b16 %v1149, %v1148
    %1182 = vmatprep.subr.bf16.mxu0 0
    %1183 = vmatpush1.bf16.msra.mxu0 %v1150
    %1184 = vmatprep.subr.bf16.mxu0 0
    %1185 = vmatpush1.bf16.msra.mxu0 %v1151
    %1186 = vmatprep.subr.bf16.mxu0 0
    %1187 = vmatpush1.bf16.msra.mxu0 %v1152
    %1188 = vmatprep.subr.bf16.mxu0 0
    %1189 = vmatpush1.bf16.msra.mxu0 %v1153
    %1190 = vmatprep.subr.bf16.mxu0 0
    %1191 = vmatpush1.bf16.msra.mxu0 %v1154
    %1192 = vmatprep.subr.bf16.mxu0 0
    %1193 = vmatpush1.bf16.msra.mxu0 %v1155
    %1194 = vmatprep.subr.bf16.mxu0 0
    %1195 = vmatpush1.bf16.msra.mxu0 %v1156
    %1196 = vmatprep.subr.bf16.mxu0 0
    %1197 = vmatpush1.bf16.msra.mxu0 %v1157
    %1198 = vmatprep.subr.bf16.mxu0 0
    %1199 = vmatpush1.bf16.msra.mxu0 %v1158
    %1200 = vmatprep.subr.bf16.mxu0 0
    %1201 = vmatpush1.bf16.msra.mxu0 %v1159
    %1202 = vmatprep.subr.bf16.mxu0 0
    %1203 = vmatpush1.bf16.msra.mxu0 %v1160
    %1204 = vmatprep.subr.bf16.mxu0 0
    %1205 = vmatpush1.bf16.msra.mxu0 %v1161
    %1206 = vmatprep.subr.bf16.mxu0 0
    %1207 = vmatpush1.bf16.msra.mxu0 %v1162
    %1208 = vmatprep.subr.bf16.mxu0 0
    %1209 = vmatpush1.bf16.msra.mxu0 %v1163
    %1210 = vmatprep.subr.bf16.mxu0 0
    %1211 = vmatpush1.bf16.msra.mxu0 %v1164
    %1212 = vmatprep.subr.bf16.mxu0 0
    %1213 = vmatpush1.bf16.msra.mxu0 %v1165
    %1214 = vmatprep.mubr.bf16.mxu0 %v1046
    %1215 = vmatmul.mubr.bf16.gmra.mrb[0].mxu0 %v1045
    %v1216 = vpop.f32.mrb[0].mxu0
    %v1217 = vadd.f32 %v1084, %v1216
    %v1218 = vpop.f32.mrb[0].mxu0
    %v1219 = vpop.f32.mrb[0].mxu0
    %v1220 = vpop.f32.mrb[0].mxu0
    %1221 = vdwg.mxu0
    %vm1222 = vcmask 254976
    %1223 = vst.msk [vmem:[#allocation5] sm:$0x3] %vm1222, %v1217
    // Predicated region
    $region26: #{tpu_custom_call.1} parent=1 // pred_check
      _
    $region27: #{tpu_custom_call.1} parent=1 // pred_check_branch
      %1225 = sbr.rel (0) target = $region29
    $region28: #{tpu_custom_call.1} parent=1 // pred_region
      %s1227 = ssub.s32 32, 32
      %1228 = vsyncadd [#allocation4], %s1227
      %s1230 = sshll.u32 [#allocation5], 4
      %s1231 = int_to_ptr.vmem [resolvable:$true] %s1230
      %1233 = dma.vmem_to_hbm [thread:$0]  %s1231, 32, %s5, [#allocation4]
    $region29: #{tpu_custom_call.1} parent=1 // pred_fallthru
      _
    // Predicated region
    $region30: #{tpu_custom_call.1} parent=1 // pred_check
      _
    $region31: #{tpu_custom_call.1} parent=1 // pred_check_branch
      %1235 = sbr.rel (0) target = $region33
    $region32: #{tpu_custom_call.1} parent=1 // pred_region
      %1236 = dma.done [#allocation4], 32
    $region33: #{tpu_custom_call.1} parent=1 // pred_fallthru
      _
    %1237 = vsyncpa [#allocation3], 1
    %1238 = vsyncpa [#allocation4], 1

</llo_original>
